<compile_context>
chip_gen: v6e
topology: v6e:2x2x1
jax: 0.10.0
libtpu: 0.0.40
codegen_flags: <defaults>
</compile_context>

<pallas_src>
import jax
import jax.numpy as jnp
import numpy as np
from jax.experimental import pallas as pl
from jax.experimental.pallas import tpu as pltpu


def _dw_conv3x3_kernel(x_ref, w_ref, o_ref):
    # x_ref: (1, H, W, Ct)  -- un-padded input tile (one batch, one channel tile)
    # w_ref: (3, 3, Ct)     -- depthwise kernel taps for this channel tile
    # o_ref: (1, H, W, Ct)
    H = o_ref.shape[1]
    W = o_ref.shape[2]
    Ct = o_ref.shape[3]
    f32 = jnp.float32
    assert H >= 3 and W >= 2, (H, W)

    # Channel chunk size: lane-aligned, small enough that the four live
    # (H, W, Cc) fp32 slabs stay within the 64-vreg file.
    if Ct % 256 == 0:
        Cc = 256
    elif Ct % 128 == 0:
        Cc = 128
    else:
        Cc = Ct  # lane-masked fallback (correct, perf only)

    for c0 in range(0, Ct, Cc):
        # One load of the whole (H, W, Cc) slab for this channel chunk.
        x = x_ref[0, :, :, c0:c0 + Cc].astype(f32)           # (H, W, Cc)

        # 9 weight taps for this chunk, hoisted once.
        w_c = w_ref[:, :, c0:c0 + Cc].astype(f32)             # (3, 3, Cc)
        taps = [[w_c[kh, kw].reshape(1, 1, Cc) for kw in range(3)]
                for kh in range(3)]

        # W-axis neighbours with zero padding at the borders: ONE concat each.
        zcol = jnp.zeros((H, 1, Cc), f32)
        x_l = jnp.concatenate([zcol, x[:, :W - 1, :]], axis=1)  # x[:, w-1]
        x_r = jnp.concatenate([x[:, 1:, :], zcol], axis=1)      # x[:, w+1]

        def row_contrib(sl, kh):
            # Contribution of input rows `sl` through kernel row `kh`
            # (kw handled by the pre-shifted slabs).
            return (x_l[sl] * taps[kh][0]
                    + x[sl] * taps[kh][1]
                    + x_r[sl] * taps[kh][2])

        # Output row h sums input rows h-1 (kh=0), h (kh=1), h+1 (kh=2);
        # out-of-range rows are the zero padding and contribute nothing.
        top = row_contrib(slice(0, 1), 1) + row_contrib(slice(1, 2), 2)
        mid = (row_contrib(slice(0, H - 2), 0)
               + row_contrib(slice(1, H - 1), 1)
               + row_contrib(slice(2, H), 2))
        bot = (row_contrib(slice(H - 2, H - 1), 0)
               + row_contrib(slice(H - 1, H), 1))

        out = jnp.concatenate([top, mid, bot], axis=0)          # (H, W, Cc)

        # One dense, lane-aligned store per chunk.
        o_ref[0, :, :, c0:c0 + Cc] = out.astype(o_ref.dtype)


def _pick_c_tile(C, max_tile=1920):
    """Largest multiple-of-128 divisor of C that is <= max_tile.

    max_tile=1920 makes the real C=3840 case run in 2 grid steps (one per
    TensorCore on v7x) instead of 6 — the kernel's HBM roofline is well below
    6x the per-step fixed overhead.  Double-buffered in+out at 1920 channels
    is ~2.9 MB of VMEM, comfortably inside every generation's default limit.
    """
    if C % 128 != 0:
        return C          # full-channel block (block dim == array dim is allowed)
    best = 128
    t = 128
    while t <= min(C, max_tile):
        if C % t == 0:
            best = t
        t += 128
    return best


def depthwise_conv3x3(x_nchw, w_oihw, c_tile=None):
    """Equivalent of nn.Conv2d(C, C, 3, stride=1, padding=1, groups=C, bias=False).

    x_nchw: (N, C, H, W) float32
    w_oihw: (C, 1, 3, 3) float32  (PyTorch depthwise weight layout)
    returns (N, C, H, W)
    """
    N, C, H, W = x_nchw.shape
    assert w_oihw.shape == (C, 1, 3, 3)

    if c_tile is None:
        c_tile = _pick_c_tile(C)
    assert C % c_tile == 0, (C, c_tile)

    # NCHW -> NHWC (channels on the lane axis). No spatial padding pass:
    # zero borders are folded into the kernel.
    x_nhwc = jnp.transpose(x_nchw, (0, 2, 3, 1))
    # (C, 1, 3, 3) -> (3, 3, C)
    w = jnp.transpose(w_oihw[:, 0, :, :], (1, 2, 0))

    out_nhwc = pl.pallas_call(
        _dw_conv3x3_kernel,
        out_shape=jax.ShapeDtypeStruct((N, H, W, C), x_nchw.dtype),
        grid_spec=pltpu.PrefetchScalarGridSpec(
            num_scalar_prefetch=0,
            # Channel tiles outer, batch inner: the weight block index is
            # constant along the inner axis, so it stays VMEM-resident.
            grid=(C // c_tile, N),
            in_specs=[
                pl.BlockSpec((1, H, W, c_tile), lambda c, n: (n, 0, 0, c)),
                pl.BlockSpec((3, 3, c_tile), lambda c, n: (0, 0, c)),
            ],
            out_specs=pl.BlockSpec((1, H, W, c_tile), lambda c, n: (n, 0, 0, c)),
        ),
        compiler_params=pltpu.CompilerParams(
            dimension_semantics=("parallel", "parallel")),
    )(x_nhwc, w)

    # NHWC -> NCHW
    return jnp.transpose(out_nhwc, (0, 3, 1, 2))


if __name__ == "__main__":
    key = jax.random.PRNGKey(0)
    kx, kw = jax.random.split(key)

    # Small stand-in shapes consistent with the module's (1, 3840, 7, 7) input:
    # channels a multiple of 128 for lane alignment, spatial 7x7.
    N, C, H, W = 2, 256, 7, 7
    x = jax.random.normal(kx, (N, C, H, W), dtype=jnp.float32)
    w = jax.random.normal(kw, (C, 1, 3, 3), dtype=jnp.float32) * 0.1

    # c_tile=128 exercises the multi-step channel grid (grid = (2, 2)).
    y = depthwise_conv3x3(x, w, c_tile=128)
    y = jax.block_until_ready(y)

    # Also exercise the default (coarse) tiling path used for the real shape.
    y2 = jax.block_until_ready(depthwise_conv3x3(x, w))

    # Reference: grouped conv via lax (same semantics as the PyTorch module).
    y_ref = jax.lax.conv_general_dilated(
        x, w, window_strides=(1, 1), padding=((1, 1), (1, 1)),
        dimension_numbers=("NCHW", "OIHW", "NCHW"),
        feature_group_count=C)

    assert y.shape == (N, C, H, W)
    np.testing.assert_allclose(np.asarray(y), np.asarray(y_ref),
                               rtol=1e-5, atol=1e-5)
    np.testing.assert_allclose(np.asarray(y2), np.asarray(y_ref),
                               rtol=1e-5, atol=1e-5)
    print("KERNEL_OK")
</pallas_src>

<mosaic_0001>
module attributes {stable_mosaic.version = 11 : i64} {
  func.func @_dw_conv3x3_kernel(%arg0: i32, %arg1: i32, %arg2: memref<1x7x7x128xf32, #tpu.memory_space<vmem>>, %arg3: memref<3x3x128xf32, #tpu.memory_space<vmem>>, %arg4: memref<1x7x7x128xf32, #tpu.memory_space<vmem>>) attributes {dimension_semantics = [#tpu.dimension_semantics<parallel>, #tpu.dimension_semantics<parallel>], iteration_bounds = array<i64: 2, 2>, scalar_prefetch = 0 : i64, scratch_operands = 0 : i64, tpu.core_type = #tpu.core_type<tc>, window_params = [{transform_indices = @transform_0, window_bounds = array<i64: 1, 7, 7, 128>}, {transform_indices = @transform_1, window_bounds = array<i64: 3, 3, 128>}, {transform_indices = @transform_2, window_bounds = array<i64: 1, 7, 7, 128>}]} {
    %c0 = arith.constant 0 : index
    %c0_0 = arith.constant 0 : index
    %c0_1 = arith.constant 0 : index
    %c0_2 = arith.constant 0 : index
    %0 = vector.load %arg2[%c0, %c0_0, %c0_1, %c0_2] : memref<1x7x7x128xf32, #tpu.memory_space<vmem>>, vector<1x7x7x128xf32>
    %1 = vector.shape_cast %0 : vector<1x7x7x128xf32> to vector<7x7x128xf32>
    %c0_3 = arith.constant 0 : index
    %c0_4 = arith.constant 0 : index
    %c0_5 = arith.constant 0 : index
    %2 = vector.load %arg3[%c0_3, %c0_4, %c0_5] : memref<3x3x128xf32, #tpu.memory_space<vmem>>, vector<3x3x128xf32>
    %3 = vector.extract_strided_slice %2 {offsets = [0, 0, 0], sizes = [1, 1, 128], strides = [1, 1, 1]} : vector<3x3x128xf32> to vector<1x1x128xf32>
    %4 = vector.shape_cast %3 : vector<1x1x128xf32> to vector<128xf32>
    %5 = vector.shape_cast %4 : vector<128xf32> to vector<1x1x128xf32>
    %6 = vector.extract_strided_slice %2 {offsets = [0, 1, 0], sizes = [1, 1, 128], strides = [1, 1, 1]} : vector<3x3x128xf32> to vector<1x1x128xf32>
    %7 = vector.shape_cast %6 : vector<1x1x128xf32> to vector<128xf32>
    %8 = vector.shape_cast %7 : vector<128xf32> to vector<1x1x128xf32>
    %9 = vector.extract_strided_slice %2 {offsets = [0, 2, 0], sizes = [1, 1, 128], strides = [1, 1, 1]} : vector<3x3x128xf32> to vector<1x1x128xf32>
    %10 = vector.shape_cast %9 : vector<1x1x128xf32> to vector<128xf32>
    %11 = vector.shape_cast %10 : vector<128xf32> to vector<1x1x128xf32>
    %12 = vector.extract_strided_slice %2 {offsets = [1, 0, 0], sizes = [1, 1, 128], strides = [1, 1, 1]} : vector<3x3x128xf32> to vector<1x1x128xf32>
    %13 = vector.shape_cast %12 : vector<1x1x128xf32> to vector<128xf32>
    %14 = vector.shape_cast %13 : vector<128xf32> to vector<1x1x128xf32>
    %15 = vector.extract_strided_slice %2 {offsets = [1, 1, 0], sizes = [1, 1, 128], strides = [1, 1, 1]} : vector<3x3x128xf32> to vector<1x1x128xf32>
    %16 = vector.shape_cast %15 : vector<1x1x128xf32> to vector<128xf32>
    %17 = vector.shape_cast %16 : vector<128xf32> to vector<1x1x128xf32>
    %18 = vector.extract_strided_slice %2 {offsets = [1, 2, 0], sizes = [1, 1, 128], strides = [1, 1, 1]} : vector<3x3x128xf32> to vector<1x1x128xf32>
    %19 = vector.shape_cast %18 : vector<1x1x128xf32> to vector<128xf32>
    %20 = vector.shape_cast %19 : vector<128xf32> to vector<1x1x128xf32>
    %21 = vector.extract_strided_slice %2 {offsets = [2, 0, 0], sizes = [1, 1, 128], strides = [1, 1, 1]} : vector<3x3x128xf32> to vector<1x1x128xf32>
    %22 = vector.shape_cast %21 : vector<1x1x128xf32> to vector<128xf32>
    %23 = vector.shape_cast %22 : vector<128xf32> to vector<1x1x128xf32>
    %24 = vector.extract_strided_slice %2 {offsets = [2, 1, 0], sizes = [1, 1, 128], strides = [1, 1, 1]} : vector<3x3x128xf32> to vector<1x1x128xf32>
    %25 = vector.shape_cast %24 : vector<1x1x128xf32> to vector<128xf32>
    %26 = vector.shape_cast %25 : vector<128xf32> to vector<1x1x128xf32>
    %27 = vector.extract_strided_slice %2 {offsets = [2, 2, 0], sizes = [1, 1, 128], strides = [1, 1, 1]} : vector<3x3x128xf32> to vector<1x1x128xf32>
    %28 = vector.shape_cast %27 : vector<1x1x128xf32> to vector<128xf32>
    %29 = vector.shape_cast %28 : vector<128xf32> to vector<1x1x128xf32>
    %cst = arith.constant 0.000000e+00 : f32
    %30 = vector.broadcast %cst : f32 to vector<7x1x128xf32>
    %31 = vector.extract_strided_slice %1 {offsets = [0, 0, 0], sizes = [7, 6, 128], strides = [1, 1, 1]} : vector<7x7x128xf32> to vector<7x6x128xf32>
    %32 = tpu.concatenate %30, %31 in 1 : vector<7x1x128xf32>, vector<7x6x128xf32> -> vector<7x7x128xf32>
    %33 = vector.extract_strided_slice %1 {offsets = [0, 1, 0], sizes = [7, 6, 128], strides = [1, 1, 1]} : vector<7x7x128xf32> to vector<7x6x128xf32>
    %34 = tpu.concatenate %33, %30 in 1 : vector<7x6x128xf32>, vector<7x1x128xf32> -> vector<7x7x128xf32>
    %35 = vector.extract_strided_slice %32 {offsets = [0, 0, 0], sizes = [1, 7, 128], strides = [1, 1, 1]} : vector<7x7x128xf32> to vector<1x7x128xf32>
    %36 = vector.broadcast %14 : vector<1x1x128xf32> to vector<1x7x128xf32>
    %37 = arith.mulf %35, %36 : vector<1x7x128xf32>
    %38 = vector.extract_strided_slice %1 {offsets = [0, 0, 0], sizes = [1, 7, 128], strides = [1, 1, 1]} : vector<7x7x128xf32> to vector<1x7x128xf32>
    %39 = vector.broadcast %17 : vector<1x1x128xf32> to vector<1x7x128xf32>
    %40 = arith.mulf %38, %39 : vector<1x7x128xf32>
    %41 = arith.addf %37, %40 : vector<1x7x128xf32>
    %42 = vector.extract_strided_slice %34 {offsets = [0, 0, 0], sizes = [1, 7, 128], strides = [1, 1, 1]} : vector<7x7x128xf32> to vector<1x7x128xf32>
    %43 = vector.broadcast %20 : vector<1x1x128xf32> to vector<1x7x128xf32>
    %44 = arith.mulf %42, %43 : vector<1x7x128xf32>
    %45 = arith.addf %41, %44 : vector<1x7x128xf32>
    %46 = vector.extract_strided_slice %32 {offsets = [1, 0, 0], sizes = [1, 7, 128], strides = [1, 1, 1]} : vector<7x7x128xf32> to vector<1x7x128xf32>
    %47 = vector.broadcast %23 : vector<1x1x128xf32> to vector<1x7x128xf32>
    %48 = arith.mulf %46, %47 : vector<1x7x128xf32>
    %49 = vector.extract_strided_slice %1 {offsets = [1, 0, 0], sizes = [1, 7, 128], strides = [1, 1, 1]} : vector<7x7x128xf32> to vector<1x7x128xf32>
    %50 = vector.broadcast %26 : vector<1x1x128xf32> to vector<1x7x128xf32>
    %51 = arith.mulf %49, %50 : vector<1x7x128xf32>
    %52 = arith.addf %48, %51 : vector<1x7x128xf32>
    %53 = vector.extract_strided_slice %34 {offsets = [1, 0, 0], sizes = [1, 7, 128], strides = [1, 1, 1]} : vector<7x7x128xf32> to vector<1x7x128xf32>
    %54 = vector.broadcast %29 : vector<1x1x128xf32> to vector<1x7x128xf32>
    %55 = arith.mulf %53, %54 : vector<1x7x128xf32>
    %56 = arith.addf %52, %55 : vector<1x7x128xf32>
    %57 = arith.addf %45, %56 : vector<1x7x128xf32>
    %58 = vector.extract_strided_slice %32 {offsets = [0, 0, 0], sizes = [5, 7, 128], strides = [1, 1, 1]} : vector<7x7x128xf32> to vector<5x7x128xf32>
    %59 = vector.broadcast %5 : vector<1x1x128xf32> to vector<5x7x128xf32>
    %60 = arith.mulf %58, %59 : vector<5x7x128xf32>
    %61 = vector.extract_strided_slice %1 {offsets = [0, 0, 0], sizes = [5, 7, 128], strides = [1, 1, 1]} : vector<7x7x128xf32> to vector<5x7x128xf32>
    %62 = vector.broadcast %8 : vector<1x1x128xf32> to vector<5x7x128xf32>
    %63 = arith.mulf %61, %62 : vector<5x7x128xf32>
    %64 = arith.addf %60, %63 : vector<5x7x128xf32>
    %65 = vector.extract_strided_slice %34 {offsets = [0, 0, 0], sizes = [5, 7, 128], strides = [1, 1, 1]} : vector<7x7x128xf32> to vector<5x7x128xf32>
    %66 = vector.broadcast %11 : vector<1x1x128xf32> to vector<5x7x128xf32>
    %67 = arith.mulf %65, %66 : vector<5x7x128xf32>
    %68 = arith.addf %64, %67 : vector<5x7x128xf32>
    %69 = vector.extract_strided_slice %32 {offsets = [1, 0, 0], sizes = [5, 7, 128], strides = [1, 1, 1]} : vector<7x7x128xf32> to vector<5x7x128xf32>
    %70 = vector.broadcast %14 : vector<1x1x128xf32> to vector<5x7x128xf32>
    %71 = arith.mulf %69, %70 : vector<5x7x128xf32>
    %72 = vector.extract_strided_slice %1 {offsets = [1, 0, 0], sizes = [5, 7, 128], strides = [1, 1, 1]} : vector<7x7x128xf32> to vector<5x7x128xf32>
    %73 = vector.broadcast %17 : vector<1x1x128xf32> to vector<5x7x128xf32>
    %74 = arith.mulf %72, %73 : vector<5x7x128xf32>
    %75 = arith.addf %71, %74 : vector<5x7x128xf32>
    %76 = vector.extract_strided_slice %34 {offsets = [1, 0, 0], sizes = [5, 7, 128], strides = [1, 1, 1]} : vector<7x7x128xf32> to vector<5x7x128xf32>
    %77 = vector.broadcast %20 : vector<1x1x128xf32> to vector<5x7x128xf32>
    %78 = arith.mulf %76, %77 : vector<5x7x128xf32>
    %79 = arith.addf %75, %78 : vector<5x7x128xf32>
    %80 = arith.addf %68, %79 : vector<5x7x128xf32>
    %81 = vector.extract_strided_slice %32 {offsets = [2, 0, 0], sizes = [5, 7, 128], strides = [1, 1, 1]} : vector<7x7x128xf32> to vector<5x7x128xf32>
    %82 = vector.broadcast %23 : vector<1x1x128xf32> to vector<5x7x128xf32>
    %83 = arith.mulf %81, %82 : vector<5x7x128xf32>
    %84 = vector.extract_strided_slice %1 {offsets = [2, 0, 0], sizes = [5, 7, 128], strides = [1, 1, 1]} : vector<7x7x128xf32> to vector<5x7x128xf32>
    %85 = vector.broadcast %26 : vector<1x1x128xf32> to vector<5x7x128xf32>
    %86 = arith.mulf %84, %85 : vector<5x7x128xf32>
    %87 = arith.addf %83, %86 : vector<5x7x128xf32>
    %88 = vector.extract_strided_slice %34 {offsets = [2, 0, 0], sizes = [5, 7, 128], strides = [1, 1, 1]} : vector<7x7x128xf32> to vector<5x7x128xf32>
    %89 = vector.broadcast %29 : vector<1x1x128xf32> to vector<5x7x128xf32>
    %90 = arith.mulf %88, %89 : vector<5x7x128xf32>
    %91 = arith.addf %87, %90 : vector<5x7x128xf32>
    %92 = arith.addf %80, %91 : vector<5x7x128xf32>
    %93 = vector.extract_strided_slice %32 {offsets = [5, 0, 0], sizes = [1, 7, 128], strides = [1, 1, 1]} : vector<7x7x128xf32> to vector<1x7x128xf32>
    %94 = vector.broadcast %5 : vector<1x1x128xf32> to vector<1x7x128xf32>
    %95 = arith.mulf %93, %94 : vector<1x7x128xf32>
    %96 = vector.extract_strided_slice %1 {offsets = [5, 0, 0], sizes = [1, 7, 128], strides = [1, 1, 1]} : vector<7x7x128xf32> to vector<1x7x128xf32>
    %97 = vector.broadcast %8 : vector<1x1x128xf32> to vector<1x7x128xf32>
    %98 = arith.mulf %96, %97 : vector<1x7x128xf32>
    %99 = arith.addf %95, %98 : vector<1x7x128xf32>
    %100 = vector.extract_strided_slice %34 {offsets = [5, 0, 0], sizes = [1, 7, 128], strides = [1, 1, 1]} : vector<7x7x128xf32> to vector<1x7x128xf32>
    %101 = vector.broadcast %11 : vector<1x1x128xf32> to vector<1x7x128xf32>
    %102 = arith.mulf %100, %101 : vector<1x7x128xf32>
    %103 = arith.addf %99, %102 : vector<1x7x128xf32>
    %104 = vector.extract_strided_slice %32 {offsets = [6, 0, 0], sizes = [1, 7, 128], strides = [1, 1, 1]} : vector<7x7x128xf32> to vector<1x7x128xf32>
    %105 = vector.broadcast %14 : vector<1x1x128xf32> to vector<1x7x128xf32>
    %106 = arith.mulf %104, %105 : vector<1x7x128xf32>
    %107 = vector.extract_strided_slice %1 {offsets = [6, 0, 0], sizes = [1, 7, 128], strides = [1, 1, 1]} : vector<7x7x128xf32> to vector<1x7x128xf32>
    %108 = vector.broadcast %17 : vector<1x1x128xf32> to vector<1x7x128xf32>
    %109 = arith.mulf %107, %108 : vector<1x7x128xf32>
    %110 = arith.addf %106, %109 : vector<1x7x128xf32>
    %111 = vector.extract_strided_slice %34 {offsets = [6, 0, 0], sizes = [1, 7, 128], strides = [1, 1, 1]} : vector<7x7x128xf32> to vector<1x7x128xf32>
    %112 = vector.broadcast %20 : vector<1x1x128xf32> to vector<1x7x128xf32>
    %113 = arith.mulf %111, %112 : vector<1x7x128xf32>
    %114 = arith.addf %110, %113 : vector<1x7x128xf32>
    %115 = arith.addf %103, %114 : vector<1x7x128xf32>
    %116 = tpu.concatenate %57, %92, %115 in 0 : vector<1x7x128xf32>, vector<5x7x128xf32>, vector<1x7x128xf32> -> vector<7x7x128xf32>
    %c0_6 = arith.constant 0 : index
    %c0_7 = arith.constant 0 : index
    %c0_8 = arith.constant 0 : index
    %c0_9 = arith.constant 0 : index
    %117 = vector.load %arg4[%c0_6, %c0_7, %c0_8, %c0_9] : memref<1x7x7x128xf32, #tpu.memory_space<vmem>>, vector<1x7x7x128xf32>
    %118 = vector.shape_cast %117 : vector<1x7x7x128xf32> to vector<7x7x128xf32>
    %119 = vector.shape_cast %116 : vector<7x7x128xf32> to vector<1x7x7x128xf32>
    tpu.vector_store %arg4[%c0_6, %c0_7, %c0_8, %c0_9], %119 {strides = array<i32>} : memref<1x7x7x128xf32, #tpu.memory_space<vmem>>, vector<1x7x7x128xf32>,
    return
  }
  func.func @transform_0(%arg0: i32, %arg1: i32) -> (i32, i32, i32, i32) {
    %c0_i32 = arith.constant 0 : i32
    %c0_i32_0 = arith.constant 0 : i32
    %c0_i32_1 = arith.constant 0 : i32
    return %arg1, %c0_i32, %c0_i32_0, %arg0 : i32, i32, i32, i32
  }
  func.func @transform_1(%arg0: i32, %arg1: i32) -> (i32, i32, i32) {
    %c0_i32 = arith.constant 0 : i32
    %c0_i32_0 = arith.constant 0 : i32
    %c0_i32_1 = arith.constant 0 : i32
    return %c0_i32, %c0_i32_0, %arg0 : i32, i32, i32
  }
  func.func @transform_2(%arg0: i32, %arg1: i32) -> (i32, i32, i32, i32) {
    %c0_i32 = arith.constant 0 : i32
    %c0_i32_0 = arith.constant 0 : i32
    %c0_i32_1 = arith.constant 0 : i32
    return %arg1, %c0_i32, %c0_i32_0, %arg0 : i32, i32, i32, i32
  }
}

</mosaic_0001>

<llo_original>
// kernel: tpu_custom_call.1
$region0: #{tpu_custom_call.1}
  #allocation0 [shape = 'u32[]', space=smem, size = 0x4, offset = 0x4, fixed_abs, tag = 'smem constant byte address 0x4 - core index']
  #allocation1 [shape = 'u32[144,128]{1,0:T(1,128)}', space=vmem, size = 0x12000, scoped, tag = 'internal scratch']
  %s0 = inlined_call_operand.vmem [shape: f32[2,7,7,256], index: 0, kind: input, shape index: {}]
  %s1 = inlined_call_operand.vmem [shape: f32[3,3,256], index: 1, kind: input, shape index: {}]
  %s2 = inlined_call_operand.vmem [shape: f32[2,7,7,256], index: 2, kind: output, shape index: {}]
  %s3 = sld [smem:[#allocation0]]
  $region154: #{tpu_custom_call.1} parent=0
    _
  %s5 = ssub.s32 1, %s3
  %s6 = scalar_select 0, %s5, %s3
  $region1: #{tpu_custom_call.1} parent=0
    #allocation2 [shape = 'u8[57344]{0}', space=vmem, size = 0xe000, scoped, tag = 'input window, operand 0']
    #allocation3 [shape = 'u8[12288]{0}', space=vmem, size = 0x3000, scoped, tag = 'input window, operand 1']
    #allocation4 [shape = 'u8[57344]{0}', space=vmem, size = 0xe000, scoped, tag = 'output window, operand 0']
    loop: start=0, step=1, limit=6
    $region2: #{tpu_custom_call.1} parent=1 // loop_pre_header
      _
    $region3: #{tpu_custom_call.1} parent=1 // loop_header
      %s8 = sphi 0, %s12
      %p9 = scmp.ge.s32.totalorder %s8, 6
      %s15 = sphi 0, %s27
      %s16 = sphi 0, %s23
      %s17 = sphi 0, %s15
      %s18 = sphi 0, %s16
      %s19 = sphi 0, %s17
      %s20 = sphi 0, %s18
      %s32 = sphi 0, %s34
      %s35 = sphi 0, %s32
      %s36 = sphi 0, %s35
      %s52 = sphi 0, %s36
      %s58 = sphi 0, %s60
      %s61 = sphi 0, %s58
      %s62 = sphi 0, %s61
      %s78 = sphi 0, %s62
      %s86 = sphi 0, %s88
      %s89 = sphi 0, %s86
      %s90 = sphi 0, %s89
      %s106 = sphi 0, %s90
    $region4: #{tpu_custom_call.1} parent=1 // loop_header_branch
      %11 = sbr.rel (%p9) target = $region8
    $region5: #{tpu_custom_call.1} parent=1 // loop_body
      %s13 = ssub.s32 %s8, 1
      %s14 = ssub.s32 %s8, 2
      %s21 = sadd.s32 1, %s16
      %p22 = scmp.ge.s32.totalorder %s21, 2
      %s23 = scalar_select %p22, 0, %s21
      %s24 = sadd.s32 1, %s15
      %s25 = scalar_select %p22, %s24, %s15
      %p26 = scmp.ge.s32.totalorder %s25, 2
      %s27 = scalar_select %p26, 0, %s25
      %s28 = ssub.s32 %s16, %s23
      %s29 = ssub.s32 %s15, %s27
      %s30 = sor.u32 %s28, %s29
      %p31 = scmp.eq.s32.totalorder %s30, 0
      %s33 = sadd.s32 %s32, 1
      %s34 = scalar_select %p31, %s32, %s33
      %p37 = pneg %p31
      %p38 = scmp.eq.s32.totalorder %s8, 3
      %p39 = por %p37, %p38
      %p40 = scmp.ne.s32.totalorder %s32, %s35
      %p41 = scmp.eq.s32.totalorder %s8, 0
      %p42 = por %p40, %p41
      %p43 = scmp.ne.s32.totalorder %s32, %s35
      %p44 = scmp.eq.s32.totalorder %s13, 3
      %p45 = por %p43, %p44
      %p46 = scmp.ne.s32.totalorder %s35, %s36
      %p47 = scmp.eq.s32.totalorder %s13, 0
      %p48 = por %p46, %p47
      %p49 = scmp.ne.s32.totalorder %s35, %s36
      %p50 = scmp.eq.s32.totalorder %s14, 3
      %p51 = por %p49, %p50
      %p53 = scmp.ne.s32.totalorder %s36, %s52
      %p54 = scmp.eq.s32.totalorder %s14, 0
      %p55 = por %p53, %p54
      %s56 = ssub.s32 %s15, %s27
      %p57 = scmp.eq.s32.totalorder %s56, 0
      %s59 = sadd.s32 %s58, 1
      %s60 = scalar_select %p57, %s58, %s59
      %p63 = pneg %p57
      %p64 = scmp.eq.s32.totalorder %s8, 3
      %p65 = por %p63, %p64
      %p66 = scmp.ne.s32.totalorder %s58, %s61
      %p67 = scmp.eq.s32.totalorder %s8, 0
      %p68 = por %p66, %p67
      %p69 = scmp.ne.s32.totalorder %s58, %s61
      %p70 = scmp.eq.s32.totalorder %s13, 3
      %p71 = por %p69, %p70
      %p72 = scmp.ne.s32.totalorder %s61, %s62
      %p73 = scmp.eq.s32.totalorder %s13, 0
      %p74 = por %p72, %p73
      %p75 = scmp.ne.s32.totalorder %s61, %s62
      %p76 = scmp.eq.s32.totalorder %s14, 3
      %p77 = por %p75, %p76
      %p79 = scmp.ne.s32.totalorder %s62, %s78
      %p80 = scmp.eq.s32.totalorder %s14, 0
      %p81 = por %p79, %p80
      %s82 = ssub.s32 %s16, %s23
      %s83 = ssub.s32 %s15, %s27
      %s84 = sor.u32 %s82, %s83
      %p85 = scmp.eq.s32.totalorder %s84, 0
      %s87 = sadd.s32 %s86, 1
      %s88 = scalar_select %p85, %s86, %s87
      %p91 = pneg %p85
      %p92 = scmp.eq.s32.totalorder %s8, 3
      %p93 = por %p91, %p92
      %p94 = scmp.ne.s32.totalorder %s86, %s89
      %p95 = scmp.eq.s32.totalorder %s8, 0
      %p96 = por %p94, %p95
      %p97 = scmp.ne.s32.totalorder %s86, %s89
      %p98 = scmp.eq.s32.totalorder %s13, 3
      %p99 = por %p97, %p98
      %p100 = scmp.ne.s32.totalorder %s89, %s90
      %p101 = scmp.eq.s32.totalorder %s13, 0
      %p102 = por %p100, %p101
      %p103 = scmp.ne.s32.totalorder %s89, %s90
      %p104 = scmp.eq.s32.totalorder %s14, 3
      %p105 = por %p103, %p104
      %p107 = scmp.ne.s32.totalorder %s90, %s106
      %p108 = scmp.eq.s32.totalorder %s14, 0
      %p109 = por %p107, %p108
      %p110 = scmp.le.s32.totalorder 1, %s8
      %p111 = scmp.lt.s32.totalorder %s8, 5
      %p112 = pnand %p110, %p111
      %p113 = pneg %p112
      // Predicated region
      $region9: #{tpu_custom_call.1} parent=5 // pred_check
        _
      $region10: #{tpu_custom_call.1} parent=5 // pred_check_branch
        %115 = sbr.rel (%p112) target = $region12
      $region11: #{tpu_custom_call.1} parent=5 // pred_region
        %s116 = ssub.s32 %s8, 1
      $region12: #{tpu_custom_call.1} parent=5 // pred_fallthru
        _
      %p117 = scmp.lt.s32.totalorder %s8, 4
      // Predicated region
      $region13: #{tpu_custom_call.1} parent=5 // pred_check
        %p118 = pneg %p117
      $region14: #{tpu_custom_call.1} parent=5 // pred_check_branch
        %120 = sbr.rel (%p118) target = $region16
      $region15: #{tpu_custom_call.1} parent=5 // pred_region
        // Predicated region
        $region17: #{tpu_custom_call.1} parent=15 // pred_check
          %p121 = pneg %p42
        $region18: #{tpu_custom_call.1} parent=15 // pred_check_branch
          %123 = sbr.rel (%p121) target = $region20
        $region19: #{tpu_custom_call.1} parent=15 // pred_region
          %s124 = sand.u32 %s32, 1
          %s125 = sand.u32 %s32, 1
          %s126 = smul.addr %s125, 56
          %s127 = scalar_lea.vmem [#allocation2], %s126
          %s128 = smul.addr %s16, 14
          %s129 = sadd.s32 %s15, %s128
          %s130 = smul.addr %s129, 8
          %s131 = scalar_lea.vmem %s0, %s130
          // Predicated region
          $region21: #{tpu_custom_call.1} parent=19 // pred_check
            _
          $region22: #{tpu_custom_call.1} parent=19 // pred_check_branch
            %133 = sbr.rel (0) target = $region24
          $region23: #{tpu_custom_call.1} parent=19 // pred_region
            // Predicated region
            $region25: #{tpu_custom_call.1} parent=23 // pred_check
              _
            $region26: #{tpu_custom_call.1} parent=23 // pred_check_branch
              %135 = sbr.rel (0) target = $region28
            $region27: #{tpu_custom_call.1} parent=23 // pred_region
              // Predicated region
              $region40: #{tpu_custom_call.1} parent=27 // pred_check
                _
              $region41: #{tpu_custom_call.1} parent=27 // pred_check_branch
                %163 = sbr.rel (0) target = $region43
              $region42: #{tpu_custom_call.1} parent=27 // pred_region
                loop: start=0, step=1, limit=1
                $region44: #{tpu_custom_call.1} parent=42 // loop_pre_header
                  _
                $region45: #{tpu_custom_call.1} parent=42 // loop_header
                  %s165 = sphi 0, %s169
                  %p166 = scmp.ge.s32.totalorder %s165, 1
                  %s170 = sphi %s131, %s131
                  %s171 = sphi %s127, %s127
                $region46: #{tpu_custom_call.1} parent=42 // loop_header_branch
                  %168 = sbr.rel (%p166) target = $region50
                $region47: #{tpu_custom_call.1} parent=42 // loop_body
                  %v172 = vld [vmem:[%s170] sm:$0xff]
                  %173 = vst [vmem:[%s171] sm:$0xff] %v172
                  %v174 = vld [vmem:[%s170 + $0x10] sm:$0xff]
                  %175 = vst [vmem:[%s171 + $0x8] sm:$0xff] %v174
                  %v176 = vld [vmem:[%s170 + $0x20] sm:$0xff]
                  %177 = vst [vmem:[%s171 + $0x10] sm:$0xff] %v176
                  %v178 = vld [vmem:[%s170 + $0x30] sm:$0xff]
                  %179 = vst [vmem:[%s171 + $0x18] sm:$0xff] %v178
                  %v180 = vld [vmem:[%s170 + $0x40] sm:$0xff]
                  %181 = vst [vmem:[%s171 + $0x20] sm:$0xff] %v180
                  %v182 = vld [vmem:[%s170 + $0x50] sm:$0xff]
                  %183 = vst [vmem:[%s171 + $0x28] sm:$0xff] %v182
                  %v184 = vld [vmem:[%s170 + $0x60] sm:$0xff]
                  %185 = vst [vmem:[%s171 + $0x30] sm:$0xff] %v184
                $region48: #{tpu_custom_call.1} parent=42 // loop_footer
                  %s169 = sadd.s32 1, %s165
                $region49: #{tpu_custom_call.1} parent=42 // loop_footer_branch
                  %164 = sbr.rel target = $region45
                $region50: #{tpu_custom_call.1} parent=42 // loop_exit
                  _
              $region43: #{tpu_custom_call.1} parent=27 // pred_fallthru
                _
              // Predicated region
              $region51: #{tpu_custom_call.1} parent=27 // pred_check
                _
              $region52: #{tpu_custom_call.1} parent=27 // pred_check_branch
                %187 = sbr.rel target = $region54
              $region53: #{tpu_custom_call.1} parent=27 // pred_region
                _
              $region54: #{tpu_custom_call.1} parent=27 // pred_fallthru
                _
            $region28: #{tpu_custom_call.1} parent=23 // pred_fallthru
              _
            // Predicated region
            $region29: #{tpu_custom_call.1} parent=23 // pred_check
              _
            $region30: #{tpu_custom_call.1} parent=23 // pred_check_branch
              %137 = sbr.rel target = $region32
            $region31: #{tpu_custom_call.1} parent=23 // pred_region
              %s139 = ssub.s32 256, 1
              loop: start=0, step=1, limit=1
              $region33: #{tpu_custom_call.1} parent=31 // loop_pre_header
                _
              $region34: #{tpu_custom_call.1} parent=31 // loop_header
                %s141 = sphi 0, %s145
                %p142 = scmp.ge.s32.totalorder %s141, 1
                %s146 = sphi %s131, %s131
                %s147 = sphi %s127, %s127
              $region35: #{tpu_custom_call.1} parent=31 // loop_header_branch
                %144 = sbr.rel (%p142) target = $region39
              $region36: #{tpu_custom_call.1} parent=31 // loop_body
                %v148 = vld [vmem:[%s146] sm:%s139]
                %149 = vst [vmem:[%s147] sm:%s139] %v148
                %v150 = vld [vmem:[%s146 + $0x10] sm:%s139]
                %151 = vst [vmem:[%s147 + $0x8] sm:%s139] %v150
                %v152 = vld [vmem:[%s146 + $0x20] sm:%s139]
                %153 = vst [vmem:[%s147 + $0x10] sm:%s139] %v152
                %v154 = vld [vmem:[%s146 + $0x30] sm:%s139]
                %155 = vst [vmem:[%s147 + $0x18] sm:%s139] %v154
                %v156 = vld [vmem:[%s146 + $0x40] sm:%s139]
                %157 = vst [vmem:[%s147 + $0x20] sm:%s139] %v156
                %v158 = vld [vmem:[%s146 + $0x50] sm:%s139]
                %159 = vst [vmem:[%s147 + $0x28] sm:%s139] %v158
                %v160 = vld [vmem:[%s146 + $0x60] sm:%s139]
                %161 = vst [vmem:[%s147 + $0x30] sm:%s139] %v160
              $region37: #{tpu_custom_call.1} parent=31 // loop_footer
                %s145 = sadd.s32 1, %s141
              $region38: #{tpu_custom_call.1} parent=31 // loop_footer_branch
                %140 = sbr.rel target = $region34
              $region39: #{tpu_custom_call.1} parent=31 // loop_exit
                _
            $region32: #{tpu_custom_call.1} parent=23 // pred_fallthru
              _
          $region24: #{tpu_custom_call.1} parent=19 // pred_fallthru
            _
          %188 = vnop
        $region20: #{tpu_custom_call.1} parent=15 // pred_fallthru
          _
        // Predicated region
        $region55: #{tpu_custom_call.1} parent=15 // pred_check
          %p189 = pneg %p68
        $region56: #{tpu_custom_call.1} parent=15 // pred_check_branch
          %191 = sbr.rel (%p189) target = $region58
        $region57: #{tpu_custom_call.1} parent=15 // pred_region
          %s192 = sand.u32 %s58, 1
          %s193 = sand.u32 %s58, 1
          %s194 = smul.addr %s193, 12
          %s195 = scalar_lea.vmem [#allocation3], %s194
          %s196 = smul.addr %s15, 4
          %s197 = scalar_lea.vmem %s1, %s196
          // Predicated region
          $region59: #{tpu_custom_call.1} parent=57 // pred_check
            _
          $region60: #{tpu_custom_call.1} parent=57 // pred_check_branch
            %199 = sbr.rel (0) target = $region62
          $region61: #{tpu_custom_call.1} parent=57 // pred_region
            // Predicated region
            $region63: #{tpu_custom_call.1} parent=61 // pred_check
              _
            $region64: #{tpu_custom_call.1} parent=61 // pred_check_branch
              %201 = sbr.rel target = $region66
            $region65: #{tpu_custom_call.1} parent=61 // pred_region
              // Predicated region
              $region78: #{tpu_custom_call.1} parent=65 // pred_check
                _
              $region79: #{tpu_custom_call.1} parent=65 // pred_check_branch
                %221 = sbr.rel (0) target = $region81
              $region80: #{tpu_custom_call.1} parent=65 // pred_region
                loop: start=0, step=1, limit=1
                $region82: #{tpu_custom_call.1} parent=80 // loop_pre_header
                  _
                $region83: #{tpu_custom_call.1} parent=80 // loop_header
                  %s223 = sphi 0, %s227
                  %p224 = scmp.ge.s32.totalorder %s223, 1
                  %s228 = sphi %s197, %s197
                  %s229 = sphi %s195, %s195
                $region84: #{tpu_custom_call.1} parent=80 // loop_header_branch
                  %226 = sbr.rel (%p224) target = $region88
                $region85: #{tpu_custom_call.1} parent=80 // loop_body
                  _
                $region86: #{tpu_custom_call.1} parent=80 // loop_footer
                  %s227 = sadd.s32 1, %s223
                $region87: #{tpu_custom_call.1} parent=80 // loop_footer_branch
                  %222 = sbr.rel target = $region83
                $region88: #{tpu_custom_call.1} parent=80 // loop_exit
                  _
                %s231 = ssub.s32 16, 1
                loop: start=0, step=1, limit=1
                $region89: #{tpu_custom_call.1} parent=80 // loop_pre_header
                  _
                $region90: #{tpu_custom_call.1} parent=80 // loop_header
                  %s233 = sphi 0, %s237
                  %p234 = scmp.ge.s32.totalorder %s233, 1
                  %s238 = sphi %s197, %s197
                  %s239 = sphi %s195, %s195
                $region91: #{tpu_custom_call.1} parent=80 // loop_header_branch
                  %236 = sbr.rel (%p234) target = $region95
                $region92: #{tpu_custom_call.1} parent=80 // loop_body
                  %v240 = vld [vmem:[%s238] sm:%s231]
                  %241 = vst [vmem:[%s239] sm:%s231] %v240
                  %v242 = vld [vmem:[%s238 + $0x8] sm:%s231]
                  %243 = vst [vmem:[%s239 + $0x4] sm:%s231] %v242
                  %v244 = vld [vmem:[%s238 + $0x10] sm:%s231]
                  %245 = vst [vmem:[%s239 + $0x8] sm:%s231] %v244
                $region93: #{tpu_custom_call.1} parent=80 // loop_footer
                  %s237 = sadd.s32 1, %s233
                $region94: #{tpu_custom_call.1} parent=80 // loop_footer_branch
                  %232 = sbr.rel target = $region90
                $region95: #{tpu_custom_call.1} parent=80 // loop_exit
                  _
              $region81: #{tpu_custom_call.1} parent=65 // pred_fallthru
                _
            $region66: #{tpu_custom_call.1} parent=61 // pred_fallthru
              _
            // Predicated region
            $region67: #{tpu_custom_call.1} parent=61 // pred_check
              _
            $region68: #{tpu_custom_call.1} parent=61 // pred_check_branch
              %203 = sbr.rel (0) target = $region70
            $region69: #{tpu_custom_call.1} parent=61 // pred_region
              %s205 = ssub.s32 16, 1
              loop: start=0, step=1, limit=1
              $region71: #{tpu_custom_call.1} parent=69 // loop_pre_header
                _
              $region72: #{tpu_custom_call.1} parent=69 // loop_header
                %s207 = sphi 0, %s211
                %p208 = scmp.ge.s32.totalorder %s207, 1
                %s212 = sphi %s197, %s197
                %s213 = sphi %s195, %s195
              $region73: #{tpu_custom_call.1} parent=69 // loop_header_branch
                %210 = sbr.rel (%p208) target = $region77
              $region74: #{tpu_custom_call.1} parent=69 // loop_body
                %v214 = vld [vmem:[%s212] sm:%s205]
                %215 = vst [vmem:[%s213] sm:%s205] %v214
                %v216 = vld [vmem:[%s212 + $0x8] sm:%s205]
                %217 = vst [vmem:[%s213 + $0x4] sm:%s205] %v216
                %v218 = vld [vmem:[%s212 + $0x10] sm:%s205]
                %219 = vst [vmem:[%s213 + $0x8] sm:%s205] %v218
              $region75: #{tpu_custom_call.1} parent=69 // loop_footer
                %s211 = sadd.s32 1, %s207
              $region76: #{tpu_custom_call.1} parent=69 // loop_footer_branch
                %206 = sbr.rel target = $region72
              $region77: #{tpu_custom_call.1} parent=69 // loop_exit
                _
            $region70: #{tpu_custom_call.1} parent=61 // pred_fallthru
              _
          $region62: #{tpu_custom_call.1} parent=57 // pred_fallthru
            _
          %246 = vnop
        $region58: #{tpu_custom_call.1} parent=15 // pred_fallthru
          _
      $region16: #{tpu_custom_call.1} parent=5 // pred_fallthru
        _
      %p247 = scmp.le.s32.totalorder 1, %s8
      %p248 = scmp.lt.s32.totalorder %s8, 5
      %p249 = pnand %p247, %p248
      %p250 = pneg %p249
      // Predicated region
      $region96: #{tpu_custom_call.1} parent=5 // pred_check
        _
      $region97: #{tpu_custom_call.1} parent=5 // pred_check_branch
        %252 = sbr.rel (%p249) target = $region99
      $region98: #{tpu_custom_call.1} parent=5 // pred_region
        %s253 = ssub.s32 %s8, 1
        %s254 = sand.u32 %s35, 1
        %s255 = sand.u32 %s35, 1
        %s256 = smul.addr %s255, 56
        %s257 = scalar_lea.vmem [#allocation2], %s256
        // Predicated region
        $region100: #{tpu_custom_call.1} parent=98 // pred_check
          %p258 = pneg %p48
        $region101: #{tpu_custom_call.1} parent=98 // pred_check_branch
          %260 = sbr.rel (%p258) target = $region103
        $region102: #{tpu_custom_call.1} parent=98 // pred_region
          _
        $region103: #{tpu_custom_call.1} parent=98 // pred_fallthru
          _
        %s261 = sand.u32 %s61, 1
        %s262 = sand.u32 %s61, 1
        %s263 = smul.addr %s262, 12
        %s264 = scalar_lea.vmem [#allocation3], %s263
        // Predicated region
        $region104: #{tpu_custom_call.1} parent=98 // pred_check
          %p265 = pneg %p74
        $region105: #{tpu_custom_call.1} parent=98 // pred_check_branch
          %267 = sbr.rel (%p265) target = $region107
        $region106: #{tpu_custom_call.1} parent=98 // pred_region
          _
        $region107: #{tpu_custom_call.1} parent=98 // pred_fallthru
          _
        %s268 = sand.u32 %s35, 1
        %s269 = sand.u32 %s35, 1
        %s270 = smul.addr %s269, 56
        %s271 = scalar_lea.vmem [#allocation2], %s270
        %p272 = pneg %p48
        %p273 = pneg %p45
        %s274 = sand.u32 %s61, 1
        %s275 = sand.u32 %s61, 1
        %s276 = smul.addr %s275, 12
        %s277 = scalar_lea.vmem [#allocation3], %s276
        %p278 = pneg %p74
        %p279 = pneg %p71
        %p280 = pneg %p102
        %p281 = pneg %p99
        %s282 = sand.u32 %s89, 1
        %s283 = sand.u32 %s89, 1
        %s284 = smul.addr %s283, 56
        %s285 = scalar_lea.vmem [#allocation4], %s284
        %v286 = vld [vmem:[%s257] sm:$0x7f]
        %v287 = vld [vmem:[%s257 + $0x8] sm:$0x7f]
        %v288 = vld [vmem:[%s257 + $0x10] sm:$0x7f]
        %v289 = vld [vmem:[%s257 + $0x18] sm:$0x7f]
        %v290 = vld [vmem:[%s257 + $0x20] sm:$0x7f]
        %v291 = vld [vmem:[%s257 + $0x28] sm:$0x7f]
        %v292 = vld [vmem:[%s257 + $0x30] sm:$0x7f]
        %v293 = vld [vmem:[%s264] sm:$0x7]
        %v294 = vld [vmem:[%s264 + $0x4] sm:$0x7]
        %v295 = vld [vmem:[%s264 + $0x8] sm:$0x7]
        %v303 = vrot.slane %v286, 7
        %v304 = vrot.slane %v287, 7
        %v305 = vrot.slane %v288, 7
        %v306 = vrot.slane %v289, 7
        %v307 = vrot.slane %v290, 7
        %v308 = vrot.slane %v291, 7
        %v309 = vrot.slane %v292, 7
        %vm317 = vcmask 1040384
        %v318 = vsel %vm317, 0.0, %v303
        %v319 = vsel %vm317, 0.0, %v304
        %v320 = vsel %vm317, 0.0, %v305
        %v321 = vsel %vm317, 0.0, %v306
        %v322 = vsel %vm317, 0.0, %v307
        %v323 = vsel %vm317, 0.0, %v308
        %v324 = vsel %vm317, 0.0, %v309
        %v325 = vrot.slane %v286, 1
        %v326 = vrot.slane %v287, 1
        %v327 = vrot.slane %v288, 1
        %v328 = vrot.slane %v289, 1
        %v329 = vrot.slane %v290, 1
        %v330 = vrot.slane %v291, 1
        %v331 = vrot.slane %v292, 1
        %vm339 = vcmask 1045504
        %v340 = vsel %vm339, %v325, 0.0
        %v341 = vsel %vm339, %v326, 0.0
        %v342 = vsel %vm339, %v327, 0.0
        %v343 = vsel %vm339, %v328, 0.0
        %v344 = vsel %vm339, %v329, 0.0
        %v345 = vsel %vm339, %v330, 0.0
        %v346 = vsel %vm339, %v331, 0.0
        %v347 = vlaneseq
        %v348 = vshrl.u32 %v347, 7
        %v349 = vsub.s32 0, %v348
        %v350 = vrot.slane %v294, %v349
        %v351 = vmul.f32 %v318, %v350
        %v352 = vlaneseq
        %v353 = vshrl.u32 %v352, 7
        %v354 = vsub.s32 1, %v353
        %v355 = vrot.slane %v294, %v354
        %v356 = vmul.f32 %v286, %v355
        %v357 = vadd.f32 %v351, %v356
        %v358 = vlaneseq
        %v359 = vshrl.u32 %v358, 7
        %v360 = vsub.s32 2, %v359
        %v361 = vrot.slane %v294, %v360
        %v362 = vmul.f32 %v340, %v361
        %v363 = vadd.f32 %v357, %v362
        %v364 = vlaneseq
        %v365 = vshrl.u32 %v364, 7
        %v366 = vsub.s32 0, %v365
        %v367 = vrot.slane %v295, %v366
        %v368 = vmul.f32 %v319, %v367
        %v369 = vlaneseq
        %v370 = vshrl.u32 %v369, 7
        %v371 = vsub.s32 1, %v370
        %v372 = vrot.slane %v295, %v371
        %v373 = vmul.f32 %v287, %v372
        %v374 = vadd.f32 %v368, %v373
        %v375 = vlaneseq
        %v376 = vshrl.u32 %v375, 7
        %v377 = vsub.s32 2, %v376
        %v378 = vrot.slane %v295, %v377
        %v379 = vmul.f32 %v341, %v378
        %v380 = vadd.f32 %v374, %v379
        %v381 = vadd.f32 %v363, %v380
        %v382 = vlaneseq
        %v383 = vshrl.u32 %v382, 7
        %v384 = vsub.s32 0, %v383
        %v385 = vrot.slane %v293, %v384
        %v386 = vmul.f32 %v318, %v385
        %v387 = vmul.f32 %v319, %v385
        %v388 = vmul.f32 %v320, %v385
        %v389 = vmul.f32 %v321, %v385
        %v390 = vmul.f32 %v322, %v385
        %v391 = vlaneseq
        %v392 = vshrl.u32 %v391, 7
        %v393 = vsub.s32 1, %v392
        %v394 = vrot.slane %v293, %v393
        %v395 = vmul.f32 %v286, %v394
        %v396 = vmul.f32 %v287, %v394
        %v397 = vmul.f32 %v288, %v394
        %v398 = vmul.f32 %v289, %v394
        %v399 = vmul.f32 %v290, %v394
        %v400 = vadd.f32 %v386, %v395
        %v401 = vadd.f32 %v387, %v396
        %v402 = vadd.f32 %v388, %v397
        %v403 = vadd.f32 %v389, %v398
        %v404 = vadd.f32 %v390, %v399
        %v405 = vlaneseq
        %v406 = vshrl.u32 %v405, 7
        %v407 = vsub.s32 2, %v406
        %v408 = vrot.slane %v293, %v407
        %v409 = vmul.f32 %v340, %v408
        %v410 = vmul.f32 %v341, %v408
        %v411 = vmul.f32 %v342, %v408
        %v412 = vmul.f32 %v343, %v408
        %v413 = vmul.f32 %v344, %v408
        %v414 = vadd.f32 %v400, %v409
        %v415 = vadd.f32 %v401, %v410
        %v416 = vadd.f32 %v402, %v411
        %v417 = vadd.f32 %v403, %v412
        %v418 = vadd.f32 %v404, %v413
        %v419 = vmul.f32 %v319, %v350
        %v420 = vmul.f32 %v320, %v350
        %v421 = vmul.f32 %v321, %v350
        %v422 = vmul.f32 %v322, %v350
        %v423 = vmul.f32 %v323, %v350
        %v424 = vmul.f32 %v287, %v355
        %v425 = vmul.f32 %v288, %v355
        %v426 = vmul.f32 %v289, %v355
        %v427 = vmul.f32 %v290, %v355
        %v428 = vmul.f32 %v291, %v355
        %v429 = vadd.f32 %v419, %v424
        %v430 = vadd.f32 %v420, %v425
        %v431 = vadd.f32 %v421, %v426
        %v432 = vadd.f32 %v422, %v427
        %v433 = vadd.f32 %v423, %v428
        %v434 = vmul.f32 %v341, %v361
        %v435 = vmul.f32 %v342, %v361
        %v436 = vmul.f32 %v343, %v361
        %v437 = vmul.f32 %v344, %v361
        %v438 = vmul.f32 %v345, %v361
        %v439 = vadd.f32 %v429, %v434
        %v440 = vadd.f32 %v430, %v435
        %v441 = vadd.f32 %v431, %v436
        %v442 = vadd.f32 %v432, %v437
        %v443 = vadd.f32 %v433, %v438
        %v444 = vadd.f32 %v414, %v439
        %v445 = vadd.f32 %v415, %v440
        %v446 = vadd.f32 %v416, %v441
        %v447 = vadd.f32 %v417, %v442
        %v448 = vadd.f32 %v418, %v443
        %v449 = vmul.f32 %v320, %v367
        %v450 = vmul.f32 %v321, %v367
        %v451 = vmul.f32 %v322, %v367
        %v452 = vmul.f32 %v323, %v367
        %v453 = vmul.f32 %v324, %v367
        %v454 = vmul.f32 %v288, %v372
        %v455 = vmul.f32 %v289, %v372
        %v456 = vmul.f32 %v290, %v372
        %v457 = vmul.f32 %v291, %v372
        %v458 = vmul.f32 %v292, %v372
        %v459 = vadd.f32 %v449, %v454
        %v460 = vadd.f32 %v450, %v455
        %v461 = vadd.f32 %v451, %v456
        %v462 = vadd.f32 %v452, %v457
        %v463 = vadd.f32 %v453, %v458
        %v464 = vmul.f32 %v342, %v378
        %v465 = vmul.f32 %v343, %v378
        %v466 = vmul.f32 %v344, %v378
        %v467 = vmul.f32 %v345, %v378
        %v468 = vmul.f32 %v346, %v378
        %v469 = vadd.f32 %v459, %v464
        %v470 = vadd.f32 %v460, %v465
        %v471 = vadd.f32 %v461, %v466
        %v472 = vadd.f32 %v462, %v467
        %v473 = vadd.f32 %v463, %v468
        %v474 = vadd.f32 %v444, %v469
        %v475 = vadd.f32 %v445, %v470
        %v476 = vadd.f32 %v446, %v471
        %v477 = vadd.f32 %v447, %v472
        %v478 = vadd.f32 %v448, %v473
        %v479 = vmul.f32 %v323, %v385
        %v480 = vmul.f32 %v291, %v394
        %v481 = vadd.f32 %v479, %v480
        %v482 = vmul.f32 %v345, %v408
        %v483 = vadd.f32 %v481, %v482
        %v484 = vmul.f32 %v324, %v350
        %v485 = vmul.f32 %v292, %v355
        %v486 = vadd.f32 %v484, %v485
        %v487 = vmul.f32 %v346, %v361
        %v488 = vadd.f32 %v486, %v487
        %v489 = vadd.f32 %v483, %v488
        %490 = vst [vmem:[%s285] sm:$0x7f] %v381
        %491 = vst [vmem:[%s285 + $0x8] sm:$0x7f] %v474
        %492 = vst [vmem:[%s285 + $0x10] sm:$0x7f] %v475
        %493 = vst [vmem:[%s285 + $0x18] sm:$0x7f] %v476
        %494 = vst [vmem:[%s285 + $0x20] sm:$0x7f] %v477
        %495 = vst [vmem:[%s285 + $0x28] sm:$0x7f] %v478
        %496 = vst [vmem:[%s285 + $0x30] sm:$0x7f] %v489
        %s497 = sand.u32 %s89, 1
        %s498 = sand.u32 %s89, 1
        %s499 = smul.addr %s498, 56
        %s500 = scalar_lea.vmem [#allocation4], %s499
        // Predicated region
        $region108: #{tpu_custom_call.1} parent=98 // pred_check
          %p501 = pneg %p99
        $region109: #{tpu_custom_call.1} parent=98 // pred_check_branch
          %503 = sbr.rel (%p501) target = $region111
        $region110: #{tpu_custom_call.1} parent=98 // pred_region
          %s504 = smul.addr %s18, 14
          %s505 = sadd.s32 %s17, %s504
          %s506 = smul.addr %s505, 8
          %s507 = scalar_lea.vmem %s2, %s506
          // Predicated region
          $region112: #{tpu_custom_call.1} parent=110 // pred_check
            _
          $region113: #{tpu_custom_call.1} parent=110 // pred_check_branch
            %509 = sbr.rel (0) target = $region115
          $region114: #{tpu_custom_call.1} parent=110 // pred_region
            // Predicated region
            $region116: #{tpu_custom_call.1} parent=114 // pred_check
              _
            $region117: #{tpu_custom_call.1} parent=114 // pred_check_branch
              %511 = sbr.rel (0) target = $region119
            $region118: #{tpu_custom_call.1} parent=114 // pred_region
              // Predicated region
              $region131: #{tpu_custom_call.1} parent=118 // pred_check
                _
              $region132: #{tpu_custom_call.1} parent=118 // pred_check_branch
                %539 = sbr.rel (0) target = $region134
              $region133: #{tpu_custom_call.1} parent=118 // pred_region
                loop: start=0, step=1, limit=1
                $region135: #{tpu_custom_call.1} parent=133 // loop_pre_header
                  _
                $region136: #{tpu_custom_call.1} parent=133 // loop_header
                  %s541 = sphi 0, %s545
                  %p542 = scmp.ge.s32.totalorder %s541, 1
                  %s546 = sphi %s500, %s500
                  %s547 = sphi %s507, %s507
                $region137: #{tpu_custom_call.1} parent=133 // loop_header_branch
                  %544 = sbr.rel (%p542) target = $region141
                $region138: #{tpu_custom_call.1} parent=133 // loop_body
                  %v548 = vld [vmem:[%s546] sm:$0xff]
                  %549 = vst [vmem:[%s547] sm:$0xff] %v548
                  %v550 = vld [vmem:[%s546 + $0x8] sm:$0xff]
                  %551 = vst [vmem:[%s547 + $0x10] sm:$0xff] %v550
                  %v552 = vld [vmem:[%s546 + $0x10] sm:$0xff]
                  %553 = vst [vmem:[%s547 + $0x20] sm:$0xff] %v552
                  %v554 = vld [vmem:[%s546 + $0x18] sm:$0xff]
                  %555 = vst [vmem:[%s547 + $0x30] sm:$0xff] %v554
                  %v556 = vld [vmem:[%s546 + $0x20] sm:$0xff]
                  %557 = vst [vmem:[%s547 + $0x40] sm:$0xff] %v556
                  %v558 = vld [vmem:[%s546 + $0x28] sm:$0xff]
                  %559 = vst [vmem:[%s547 + $0x50] sm:$0xff] %v558
                  %v560 = vld [vmem:[%s546 + $0x30] sm:$0xff]
                  %561 = vst [vmem:[%s547 + $0x60] sm:$0xff] %v560
                $region139: #{tpu_custom_call.1} parent=133 // loop_footer
                  %s545 = sadd.s32 1, %s541
                $region140: #{tpu_custom_call.1} parent=133 // loop_footer_branch
                  %540 = sbr.rel target = $region136
                $region141: #{tpu_custom_call.1} parent=133 // loop_exit
                  _
              $region134: #{tpu_custom_call.1} parent=118 // pred_fallthru
                _
              // Predicated region
              $region142: #{tpu_custom_call.1} parent=118 // pred_check
                _
              $region143: #{tpu_custom_call.1} parent=118 // pred_check_branch
                %563 = sbr.rel target = $region145
              $region144: #{tpu_custom_call.1} parent=118 // pred_region
                _
              $region145: #{tpu_custom_call.1} parent=118 // pred_fallthru
                _
            $region119: #{tpu_custom_call.1} parent=114 // pred_fallthru
              _
            // Predicated region
            $region120: #{tpu_custom_call.1} parent=114 // pred_check
              _
            $region121: #{tpu_custom_call.1} parent=114 // pred_check_branch
              %513 = sbr.rel target = $region123
            $region122: #{tpu_custom_call.1} parent=114 // pred_region
              %s515 = ssub.s32 256, 1
              loop: start=0, step=1, limit=1
              $region124: #{tpu_custom_call.1} parent=122 // loop_pre_header
                _
              $region125: #{tpu_custom_call.1} parent=122 // loop_header
                %s517 = sphi 0, %s521
                %p518 = scmp.ge.s32.totalorder %s517, 1
                %s522 = sphi %s500, %s500
                %s523 = sphi %s507, %s507
              $region126: #{tpu_custom_call.1} parent=122 // loop_header_branch
                %520 = sbr.rel (%p518) target = $region130
              $region127: #{tpu_custom_call.1} parent=122 // loop_body
                %v524 = vld [vmem:[%s522] sm:%s515]
                %525 = vst [vmem:[%s523] sm:%s515] %v524
                %v526 = vld [vmem:[%s522 + $0x8] sm:%s515]
                %527 = vst [vmem:[%s523 + $0x10] sm:%s515] %v526
                %v528 = vld [vmem:[%s522 + $0x10] sm:%s515]
                %529 = vst [vmem:[%s523 + $0x20] sm:%s515] %v528
                %v530 = vld [vmem:[%s522 + $0x18] sm:%s515]
                %531 = vst [vmem:[%s523 + $0x30] sm:%s515] %v530
                %v532 = vld [vmem:[%s522 + $0x20] sm:%s515]
                %533 = vst [vmem:[%s523 + $0x40] sm:%s515] %v532
                %v534 = vld [vmem:[%s522 + $0x28] sm:%s515]
                %535 = vst [vmem:[%s523 + $0x50] sm:%s515] %v534
                %v536 = vld [vmem:[%s522 + $0x30] sm:%s515]
                %537 = vst [vmem:[%s523 + $0x60] sm:%s515] %v536
              $region128: #{tpu_custom_call.1} parent=122 // loop_footer
                %s521 = sadd.s32 1, %s517
              $region129: #{tpu_custom_call.1} parent=122 // loop_footer_branch
                %516 = sbr.rel target = $region125
              $region130: #{tpu_custom_call.1} parent=122 // loop_exit
                _
            $region123: #{tpu_custom_call.1} parent=114 // pred_fallthru
              _
          $region115: #{tpu_custom_call.1} parent=110 // pred_fallthru
            _
          %564 = vnop
        $region111: #{tpu_custom_call.1} parent=98 // pred_fallthru
          _
      $region99: #{tpu_custom_call.1} parent=5 // pred_fallthru
        _
      %p565 = scmp.le.s32.totalorder 2, %s8
      // Predicated region
      $region146: #{tpu_custom_call.1} parent=5 // pred_check
        %p566 = pneg %p565
      $region147: #{tpu_custom_call.1} parent=5 // pred_check_branch
        %568 = sbr.rel (%p566) target = $region149
      $region148: #{tpu_custom_call.1} parent=5 // pred_region
        %s569 = ssub.s32 %s8, 2
        // Predicated region
        $region150: #{tpu_custom_call.1} parent=148 // pred_check
          %p570 = pneg %p105
        $region151: #{tpu_custom_call.1} parent=148 // pred_check_branch
          %572 = sbr.rel (%p570) target = $region153
        $region152: #{tpu_custom_call.1} parent=148 // pred_region
          %s573 = sand.u32 %s90, 1
          %s574 = sand.u32 %s90, 1
          %s575 = smul.addr %s574, 56
          %s576 = scalar_lea.vmem [#allocation4], %s575
        $region153: #{tpu_custom_call.1} parent=148 // pred_fallthru
          _
      $region149: #{tpu_custom_call.1} parent=5 // pred_fallthru
        _
    $region6: #{tpu_custom_call.1} parent=1 // loop_footer
      %s12 = sadd.s32 1, %s8
    $region7: #{tpu_custom_call.1} parent=1 // loop_footer_branch
      %7 = sbr.rel target = $region3
    $region8: #{tpu_custom_call.1} parent=1 // loop_exit
      _

</llo_original>
